<compile_context>
chip_gen: v6e
topology: v6e:2x2x1
jax: 0.10.0
libtpu: 0.0.40
codegen_flags: <defaults>
</compile_context>

<pallas_src>
import jax
import jax.numpy as jnp
from jax.experimental import pallas as pl
from jax.experimental.pallas import tpu as pltpu

EPS = 1e-5
LANES = 128


def _round_up(x, m):
    return (x + m - 1) // m * m


# ---------------------------------------------------------------------------
# Kernel A: ConvTranspose1d(kernel=2, stride=2) as a single fused matmul.
#   y[n, t, k*Cp + co] = sum_ci x[n, t, ci] * Wfused[ci, k*Cp + co] + bfused
# The wrapper's row-major reshape (N, L, 2*Cp) -> (N, 2L, Cp) places tap k of
# step t at position 2t+k (the stride-2 upsample) with zero data movement in
# the kernel.
# ---------------------------------------------------------------------------
def _upsample_kernel(x_ref, w_ref, b_ref, o_ref):
    # x: (1, L, Cin) bf16, w: (Cin, 2*Cp) bf16, b: (1, 2*Cp) f32, o: (1, L, 2*Cp) bf16
    x = x_ref[0]                                              # (L, Cin)
    y = jnp.dot(x, w_ref[...], preferred_element_type=jnp.float32) + b_ref[...]
    o_ref[0] = y.astype(o_ref.dtype)


# ---------------------------------------------------------------------------
# Kernel B: fused  [F.pad + channel-concat] + conv_block
#   conv1(cat([x_up, skip])) == conv1_a(x_up) + conv1_b(skip)   (split weights)
#   Conv1d(k=3,p=1) -> BN(train) -> ReLU -> Conv1d(k=3,p=1) -> BN -> ReLU
# Length padding handled via pre-zeroed VMEM scratch buffers.
# ---------------------------------------------------------------------------
def _decoder_conv_kernel(xup_ref, skip_ref,
                         w1a_ref, w1b_ref, b1_ref, g1_ref, be1_ref,
                         w2_ref, b2_ref, g2_ref, be2_ref,
                         o_ref, xpad_sc, hpad_sc):
    N, Lp2, Cp = skip_ref.shape
    L = Lp2 - 2
    up_len = xup_ref.shape[1]          # 2 * L_in
    lo = (L - up_len) // 2             # F.pad left amount (static, >= 0)

    # Place the upsampled sequence into a zeroed scratch that carries both the
    # F.pad offset and the conv padding of 1 (rows outside the window stay 0).
    xpad_sc[...] = jnp.zeros_like(xpad_sc)
    xpad_sc[:, 1 + lo:1 + lo + up_len, :] = xup_ref[...]

    def conv3(pad_ref, wk_ref):
        # pad_ref: (N, L+2, Cp) bf16 length-padded; wk: (3, Cp, Cp) bf16
        acc = jnp.dot(pad_ref[:, 0:L, :].reshape(N * L, Cp), wk_ref[0],
                      preferred_element_type=jnp.float32)
        acc = acc + jnp.dot(pad_ref[:, 1:L + 1, :].reshape(N * L, Cp), wk_ref[1],
                            preferred_element_type=jnp.float32)
        acc = acc + jnp.dot(pad_ref[:, 2:L + 2, :].reshape(N * L, Cp), wk_ref[2],
                            preferred_element_type=jnp.float32)
        return acc                                            # (N*L, Cp) f32

    def bn_relu(h, gamma, beta):
        # training-mode BatchNorm1d over the N*L rows, single pass, f32 stats
        m = float(N * L)
        s1 = jnp.sum(h, axis=0, keepdims=True)
        s2 = jnp.sum(h * h, axis=0, keepdims=True)
        mean = s1 * (1.0 / m)
        var = jnp.maximum(s2 * (1.0 / m) - mean * mean, 0.0)  # biased variance
        inv = jax.lax.rsqrt(var + EPS)                        # EUP rsqrt
        return jnp.maximum((h - mean) * inv * gamma + beta, 0.0)

    # --- conv1 on the virtual concat, via split weights ---------------------
    h = conv3(xpad_sc, w1a_ref) + conv3(skip_ref, w1b_ref) + b1_ref[...]
    h = bn_relu(h, g1_ref[...], be1_ref[...])

    # --- re-pad intermediate via scratch, then conv2 ------------------------
    hpad_sc[...] = jnp.zeros_like(hpad_sc)
    hpad_sc[:, 1:L + 1, :] = h.reshape(N, L, Cp).astype(hpad_sc.dtype)

    h2 = conv3(hpad_sc, w2_ref) + b2_ref[...]
    h2 = bn_relu(h2, g2_ref[...], be2_ref[...])
    o_ref[...] = h2.reshape(N, L, Cp)


# ---------------------------------------------------------------------------
# Wrapper
# ---------------------------------------------------------------------------
def decoder_block_forward(inputs_ncl, skip_ncl, p):
    N, in_c, L_in = inputs_ncl.shape
    out_c = p["up_w"].shape[1]
    L_skip = skip_ncl.shape[2]
    diff = L_skip - 2 * L_in
    assert diff >= 0, "skip length must be >= upsampled length"
    Cp = _round_up(out_c, LANES)

    # ---- layout / padding prep (small, fused XLA ops) -----------------------
    x = jnp.transpose(inputs_ncl, (0, 2, 1)).astype(jnp.bfloat16)     # (N, L_in, in_c)

    skip = jnp.transpose(skip_ncl, (0, 2, 1))                         # (N, L_skip, out_c)
    skip_pad = jnp.pad(skip, ((0, 0), (1, 1), (0, Cp - out_c))).astype(jnp.bfloat16)

    # fused ConvTranspose weight: [tap0 | tap1] along the output-channel axis
    wt = jnp.pad(p["up_w"], ((0, 0), (0, Cp - out_c), (0, 0)))        # (in_c, Cp, 2)
    wup = jnp.concatenate([wt[:, :, 0], wt[:, :, 1]], axis=1).astype(jnp.bfloat16)
    bup_half = jnp.pad(p["up_b"], (0, Cp - out_c))
    bup = jnp.concatenate([bup_half, bup_half]).reshape(1, 2 * Cp).astype(jnp.float32)

    # conv weights: PyTorch (Cout, Cin, 3) -> (3, Cin, Cout); split conv1 along Cin
    w1k = jnp.transpose(p["c1_w"], (2, 1, 0))                         # (3, 2*out_c, out_c)
    w1a = jnp.pad(w1k[:, :out_c, :],
                  ((0, 0), (0, Cp - out_c), (0, Cp - out_c))).astype(jnp.bfloat16)
    w1b = jnp.pad(w1k[:, out_c:, :],
                  ((0, 0), (0, Cp - out_c), (0, Cp - out_c))).astype(jnp.bfloat16)
    w2k = jnp.transpose(p["c2_w"], (2, 1, 0))
    w2 = jnp.pad(w2k, ((0, 0), (0, Cp - out_c), (0, Cp - out_c))).astype(jnp.bfloat16)

    def vec(v, fill=0.0):
        return jnp.pad(v, (0, Cp - out_c),
                       constant_values=fill).reshape(1, Cp).astype(jnp.float32)

    b1, b2 = vec(p["c1_b"]), vec(p["c2_b"])
    g1, g2 = vec(p["bn1_g"], 1.0), vec(p["bn2_g"], 1.0)
    be1, be2 = vec(p["bn1_b"]), vec(p["bn2_b"])

    # ---- Kernel A: fused ConvTranspose matmul, batch-parallel grid ----------
    y = pl.pallas_call(
        _upsample_kernel,
        out_shape=jax.ShapeDtypeStruct((N, L_in, 2 * Cp), jnp.bfloat16),
        grid=(N,),
        in_specs=[pl.BlockSpec((1, L_in, in_c), lambda n: (n, 0, 0)),
                  pl.BlockSpec((in_c, 2 * Cp), lambda n: (0, 0)),
                  pl.BlockSpec((1, 2 * Cp), lambda n: (0, 0))],
        out_specs=pl.BlockSpec((1, L_in, 2 * Cp), lambda n: (n, 0, 0)),
        compiler_params=pltpu.CompilerParams(
            dimension_semantics=("parallel",),
            vmem_limit_bytes=32 * 1024 * 1024),
    )(x, wup, bup)

    # stride-2 interleave: row-major (N, L, 2*Cp) -> (N, 2L, Cp) puts tap k at 2t+k
    x_up = y.reshape(N, 2 * L_in, Cp)

    # ---- Kernel B: fused pad + concat + conv_block --------------------------
    vmem = pl.BlockSpec(memory_space=pltpu.MemorySpace.VMEM)
    out_pad = pl.pallas_call(
        _decoder_conv_kernel,
        out_shape=jax.ShapeDtypeStruct((N, L_skip, Cp), jnp.float32),
        in_specs=[vmem] * 11,
        out_specs=vmem,
        scratch_shapes=[pltpu.VMEM((N, L_skip + 2, Cp), jnp.bfloat16),
                        pltpu.VMEM((N, L_skip + 2, Cp), jnp.bfloat16)],
        compiler_params=pltpu.CompilerParams(vmem_limit_bytes=32 * 1024 * 1024),
    )(x_up, skip_pad, w1a, w1b, b1, g1, be1, w2, b2, g2, be2)

    # drop zero-padded channels, back to PyTorch NCL layout
    return jnp.transpose(out_pad[:, :, :out_c], (0, 2, 1))


# ---------------------------------------------------------------------------
# Deterministic parameter init (shapes from the PyTorch module __init__)
# ---------------------------------------------------------------------------
def init_params(key, in_c, out_c):
    ks = jax.random.split(key, 6)
    cc = out_c + out_c
    return {
        "up_w": 0.1 * jax.random.normal(ks[0], (in_c, out_c, 2), jnp.float32),
        "up_b": 0.1 * jax.random.normal(ks[1], (out_c,), jnp.float32),
        "c1_w": 0.1 * jax.random.normal(ks[2], (out_c, cc, 3), jnp.float32),
        "c1_b": 0.1 * jax.random.normal(ks[3], (out_c,), jnp.float32),
        "bn1_g": jnp.linspace(0.8, 1.2, out_c, dtype=jnp.float32),
        "bn1_b": jnp.linspace(-0.1, 0.1, out_c, dtype=jnp.float32),
        "c2_w": 0.1 * jax.random.normal(ks[4], (out_c, out_c, 3), jnp.float32),
        "c2_b": 0.1 * jax.random.normal(ks[5], (out_c,), jnp.float32),
        "bn2_g": jnp.linspace(1.2, 0.8, out_c, dtype=jnp.float32),
        "bn2_b": jnp.linspace(0.1, -0.1, out_c, dtype=jnp.float32),
    }


# Pure-jnp f32 reference mirroring the PyTorch forward (training-mode BN)
def ref_forward(inputs, skip, p):
    N, Cin, L = inputs.shape
    W = p["up_w"]
    Cout = W.shape[1]
    y = jnp.einsum("nct,cok->ntko", inputs, W).reshape(N, 2 * L, Cout)
    y = y + p["up_b"][None, None, :]
    L_skip = skip.shape[2]
    diff = L_skip - 2 * L
    y = jnp.pad(y, ((0, 0), (diff // 2, diff - diff // 2), (0, 0)))
    x = jnp.concatenate([y, jnp.transpose(skip, (0, 2, 1))], axis=-1)

    def conv3(x, w, b):
        xp = jnp.pad(x, ((0, 0), (1, 1), (0, 0)))
        return (jnp.einsum("nlc,oc->nlo", xp[:, 0:-2], w[:, :, 0])
                + jnp.einsum("nlc,oc->nlo", xp[:, 1:-1], w[:, :, 1])
                + jnp.einsum("nlc,oc->nlo", xp[:, 2:], w[:, :, 2])) + b

    def bn_relu(h, g, b):
        m = h.mean(axis=(0, 1), keepdims=True)
        v = ((h - m) ** 2).mean(axis=(0, 1), keepdims=True)
        return jnp.maximum((h - m) / jnp.sqrt(v + EPS) * g + b, 0.0)

    h = bn_relu(conv3(x, p["c1_w"], p["c1_b"]), p["bn1_g"], p["bn1_b"])
    h = bn_relu(conv3(h, p["c2_w"], p["c2_b"]), p["bn2_g"], p["bn2_b"])
    return jnp.transpose(h, (0, 2, 1))


if __name__ == "__main__":
    N, in_c, out_c, L_in = 2, 8, 4, 8
    L_skip = 2 * L_in

    key = jax.random.PRNGKey(0)
    k_in, k_skip, k_par = jax.random.split(key, 3)
    inputs = jax.random.normal(k_in, (N, in_c, L_in), jnp.float32)    # NCL
    skip = jax.random.normal(k_skip, (N, out_c, L_skip), jnp.float32)
    params = init_params(k_par, in_c, out_c)

    out = decoder_block_forward(inputs, skip, params)
    out = jax.block_until_ready(out)
    assert out.shape == (N, out_c, L_skip), out.shape

    ref = ref_forward(inputs, skip, params)
    err = float(jnp.max(jnp.abs(out - ref)))
    # bf16 MXU operands with f32 accumulation -> relaxed tolerance vs f32 ref
    assert jnp.allclose(out, ref, atol=5e-2, rtol=5e-2), err

    print("KERNEL_OK")
</pallas_src>

<mosaic_0001>
module attributes {stable_mosaic.version = 11 : i64} {
  func.func @_upsample_kernel(%arg0: i32, %arg1: memref<1x8x8xbf16, #tpu.memory_space<vmem>>, %arg2: memref<8x256xbf16, #tpu.memory_space<vmem>>, %arg3: memref<1x256xf32, #tpu.memory_space<vmem>>, %arg4: memref<1x8x256xbf16, #tpu.memory_space<vmem>>) attributes {dimension_semantics = [#tpu.dimension_semantics<parallel>], iteration_bounds = array<i64: 2>, scalar_prefetch = 0 : i64, scratch_operands = 0 : i64, tpu.core_type = #tpu.core_type<tc>, window_params = [{transform_indices = @transform_0, window_bounds = array<i64: 1, 8, 8>}, {pipeline_mode = #tpu.pipeline_mode<synchronous>, transform_indices = @transform_1, window_bounds = array<i64: 8, 256>}, {pipeline_mode = #tpu.pipeline_mode<synchronous>, transform_indices = @transform_2, window_bounds = array<i64: 1, 256>}, {transform_indices = @transform_3, window_bounds = array<i64: 1, 8, 256>}]} {
    %c0 = arith.constant 0 : index
    %c0_0 = arith.constant 0 : index
    %c0_1 = arith.constant 0 : index
    %0 = vector.load %arg1[%c0, %c0_0, %c0_1] : memref<1x8x8xbf16, #tpu.memory_space<vmem>>, vector<1x8x8xbf16>
    %1 = vector.shape_cast %0 : vector<1x8x8xbf16> to vector<8x8xbf16>
    %c0_2 = arith.constant 0 : index
    %c0_3 = arith.constant 0 : index
    %2 = vector.load %arg2[%c0_2, %c0_3] : memref<8x256xbf16, #tpu.memory_space<vmem>>, vector<8x256xbf16>
    %cst = arith.constant dense<0.000000e+00> : vector<8x256xf32>
    %3 = tpu.matmul %1, %2, %cst {dimension_numbers = #tpu.dot_dimension_numbers<[1], [0], [0], [1], [0, 0, 1, 1], [], []>} : vector<8x8xbf16>, vector<8x256xbf16>, vector<8x256xf32> -> vector<8x256xf32>
    %c0_4 = arith.constant 0 : index
    %c0_5 = arith.constant 0 : index
    %4 = vector.load %arg3[%c0_4, %c0_5] : memref<1x256xf32, #tpu.memory_space<vmem>>, vector<1x256xf32>
    %5 = vector.broadcast %4 : vector<1x256xf32> to vector<8x256xf32>
    %6 = arith.addf %3, %5 : vector<8x256xf32>
    %7 = arith.truncf %6 : vector<8x256xf32> to vector<8x256xbf16>
    %c0_6 = arith.constant 0 : index
    %c0_7 = arith.constant 0 : index
    %c0_8 = arith.constant 0 : index
    %8 = vector.load %arg4[%c0_6, %c0_7, %c0_8] : memref<1x8x256xbf16, #tpu.memory_space<vmem>>, vector<1x8x256xbf16>
    %9 = vector.shape_cast %8 : vector<1x8x256xbf16> to vector<8x256xbf16>
    %10 = vector.shape_cast %7 : vector<8x256xbf16> to vector<1x8x256xbf16>
    tpu.vector_store %arg4[%c0_6, %c0_7, %c0_8], %10 {strides = array<i32>} : memref<1x8x256xbf16, #tpu.memory_space<vmem>>, vector<1x8x256xbf16>,
    return
  }
  func.func @transform_0(%arg0: i32) -> (i32, i32, i32) {
    %c0_i32 = arith.constant 0 : i32
    %c0_i32_0 = arith.constant 0 : i32
    %c0_i32_1 = arith.constant 0 : i32
    return %arg0, %c0_i32, %c0_i32_0 : i32, i32, i32
  }
  func.func @transform_1(%arg0: i32) -> (i32, i32) {
    %c0_i32 = arith.constant 0 : i32
    %c0_i32_0 = arith.constant 0 : i32
    %c0_i32_1 = arith.constant 0 : i32
    return %c0_i32, %c0_i32_0 : i32, i32
  }
  func.func @transform_2(%arg0: i32) -> (i32, i32) {
    %c0_i32 = arith.constant 0 : i32
    %c0_i32_0 = arith.constant 0 : i32
    %c0_i32_1 = arith.constant 0 : i32
    return %c0_i32, %c0_i32_0 : i32, i32
  }
  func.func @transform_3(%arg0: i32) -> (i32, i32, i32) {
    %c0_i32 = arith.constant 0 : i32
    %c0_i32_0 = arith.constant 0 : i32
    %c0_i32_1 = arith.constant 0 : i32
    return %arg0, %c0_i32, %c0_i32_0 : i32, i32, i32
  }
}

</mosaic_0001>

<llo_original>
// kernel: tpu_custom_call.1
$region0: #{tpu_custom_call.1}
  #allocation0 [shape = 'u32[]', space=smem, size = 0x4, offset = 0x4, fixed_abs, tag = 'smem constant byte address 0x4 - core index']
  #allocation1 [shape = 'u32[144,128]{1,0:T(1,128)}', space=vmem, size = 0x12000, scoped, tag = 'internal scratch']
  %s0 = inlined_call_operand.hbm [shape: bf16[2,8,8], index: 0, kind: input, shape index: {}]
  %s1 = inlined_call_operand.hbm [shape: bf16[8,256], index: 1, kind: input, shape index: {}]
  %s2 = inlined_call_operand.vmem [shape: f32[1,256], index: 2, kind: input, shape index: {}]
  %s3 = inlined_call_operand.hbm [shape: bf16[2,8,256], index: 3, kind: output, shape index: {}]
  %s4 = sld [smem:[#allocation0]]
  $region53: #{tpu_custom_call.1} parent=0
    _
  %s6 = ssub.s32 1, %s4
  %s7 = scalar_select 0, %s6, %s4
  $region1: #{tpu_custom_call.1} parent=0
    #allocation2 [shape = 'u8[4096]{0}', space=vmem, size = 0x1000, scoped, tag = 'input window, operand 0']
    #allocation3 [shape = 's32[2]{0}', space=sflag, size = 0x8, scoped, tag = 'scoped memory for tpu_custom_call.1']
    #allocation4 [shape = 's32[2]{0}', space=sflag, size = 0x8, scoped, tag = 'scoped memory for tpu_custom_call.1']
    #allocation5 [shape = 'u8[4096]{0}', space=vmem, size = 0x1000, scoped, tag = 'input window, operand 1, single buffered']
    #allocation6 [shape = 's32[1]{0}', space=sflag, size = 0x4, scoped, tag = 'scoped memory for tpu_custom_call.1']
    #allocation7 [shape = 'u8[8192]{0}', space=vmem, size = 0x2000, scoped, tag = 'output window, operand 0']
    %8 = vsyncpa [#allocation3], 0
    %s9 = scalar_lea.sflag [#allocation3], 1
    %10 = vsyncpa %s9, 0
    %11 = vsyncpa [#allocation6], 0
    %12 = vsyncpa [#allocation4], 0
    %s13 = scalar_lea.sflag [#allocation4], 1
    %14 = vsyncpa %s13, 0
    loop: start=0, step=1, limit=4
    $region2: #{tpu_custom_call.1} parent=1 // loop_pre_header
      _
    $region3: #{tpu_custom_call.1} parent=1 // loop_header
      %s16 = sphi 0, %s20
      %p17 = scmp.ge.s32.totalorder %s16, 4
      %s26 = sphi 0, %s28
      %s29 = sphi 0, %s26
      %s30 = sphi 0, %s29
      %s46 = sphi 0, %s30
      %s50 = sphi 0, %s50
      %s52 = sphi 0, %s50
      %s53 = sphi 0, %s52
      %s67 = sphi 0, %s53
      %s71 = sphi 0, %s71
      %s73 = sphi 0, %s71
      %s74 = sphi 0, %s73
      %s88 = sphi 0, %s74
      %s94 = sphi 0, %s96
      %s97 = sphi 0, %s94
      %s98 = sphi 0, %s97
      %s114 = sphi 0, %s98
    $region4: #{tpu_custom_call.1} parent=1 // loop_header_branch
      %19 = sbr.rel (%p17) target = $region8
    $region5: #{tpu_custom_call.1} parent=1 // loop_body
      %s21 = ssub.s32 %s16, 1
      %s22 = ssub.s32 %s16, 2
      %s23 = sadd.s32 %s16, 1
      %s24 = ssub.s32 %s16, %s23
      %p25 = scmp.eq.s32.totalorder %s24, 0
      %s27 = sadd.s32 %s26, 1
      %s28 = scalar_select %p25, %s26, %s27
      %p31 = pneg %p25
      %p32 = scmp.eq.s32.totalorder %s16, 1
      %p33 = por %p31, %p32
      %p34 = scmp.ne.s32.totalorder %s26, %s29
      %p35 = scmp.eq.s32.totalorder %s16, 0
      %p36 = por %p34, %p35
      %p37 = scmp.ne.s32.totalorder %s26, %s29
      %p38 = scmp.eq.s32.totalorder %s21, 1
      %p39 = por %p37, %p38
      %p40 = scmp.ne.s32.totalorder %s29, %s30
      %p41 = scmp.eq.s32.totalorder %s21, 0
      %p42 = por %p40, %p41
      %p43 = scmp.ne.s32.totalorder %s29, %s30
      %p44 = scmp.eq.s32.totalorder %s22, 1
      %p45 = por %p43, %p44
      %p47 = scmp.ne.s32.totalorder %s30, %s46
      %p48 = scmp.eq.s32.totalorder %s22, 0
      %p49 = por %p47, %p48
      %s51 = sadd.s32 %s50, 1
      %p54 = scmp.eq.s32.totalorder %s16, 1
      %p55 = scmp.ne.s32.totalorder %s50, %s52
      %p56 = scmp.eq.s32.totalorder %s16, 0
      %p57 = por %p55, %p56
      %p58 = scmp.ne.s32.totalorder %s50, %s52
      %p59 = scmp.eq.s32.totalorder %s21, 1
      %p60 = por %p58, %p59
      %p61 = scmp.ne.s32.totalorder %s52, %s53
      %p62 = scmp.eq.s32.totalorder %s21, 0
      %p63 = por %p61, %p62
      %p64 = scmp.ne.s32.totalorder %s52, %s53
      %p65 = scmp.eq.s32.totalorder %s22, 1
      %p66 = por %p64, %p65
      %p68 = scmp.ne.s32.totalorder %s53, %s67
      %p69 = scmp.eq.s32.totalorder %s22, 0
      %p70 = por %p68, %p69
      %s72 = sadd.s32 %s71, 1
      %p75 = scmp.eq.s32.totalorder %s16, 1
      %p76 = scmp.ne.s32.totalorder %s71, %s73
      %p77 = scmp.eq.s32.totalorder %s16, 0
      %p78 = por %p76, %p77
      %p79 = scmp.ne.s32.totalorder %s71, %s73
      %p80 = scmp.eq.s32.totalorder %s21, 1
      %p81 = por %p79, %p80
      %p82 = scmp.ne.s32.totalorder %s73, %s74
      %p83 = scmp.eq.s32.totalorder %s21, 0
      %p84 = por %p82, %p83
      %p85 = scmp.ne.s32.totalorder %s73, %s74
      %p86 = scmp.eq.s32.totalorder %s22, 1
      %p87 = por %p85, %p86
      %p89 = scmp.ne.s32.totalorder %s74, %s88
      %p90 = scmp.eq.s32.totalorder %s22, 0
      %p91 = por %p89, %p90
      %s92 = ssub.s32 %s16, %s23
      %p93 = scmp.eq.s32.totalorder %s92, 0
      %s95 = sadd.s32 %s94, 1
      %s96 = scalar_select %p93, %s94, %s95
      %p99 = pneg %p93
      %p100 = scmp.eq.s32.totalorder %s16, 1
      %p101 = por %p99, %p100
      %p102 = scmp.ne.s32.totalorder %s94, %s97
      %p103 = scmp.eq.s32.totalorder %s16, 0
      %p104 = por %p102, %p103
      %p105 = scmp.ne.s32.totalorder %s94, %s97
      %p106 = scmp.eq.s32.totalorder %s21, 1
      %p107 = por %p105, %p106
      %p108 = scmp.ne.s32.totalorder %s97, %s98
      %p109 = scmp.eq.s32.totalorder %s21, 0
      %p110 = por %p108, %p109
      %p111 = scmp.ne.s32.totalorder %s97, %s98
      %p112 = scmp.eq.s32.totalorder %s22, 1
      %p113 = por %p111, %p112
      %p115 = scmp.ne.s32.totalorder %s98, %s114
      %p116 = scmp.eq.s32.totalorder %s22, 0
      %p117 = por %p115, %p116
      %p118 = scmp.le.s32.totalorder 1, %s16
      %p119 = scmp.lt.s32.totalorder %s16, 3
      %p120 = pnand %p118, %p119
      %p121 = pneg %p120
      // Predicated region
      $region9: #{tpu_custom_call.1} parent=5 // pred_check
        _
      $region10: #{tpu_custom_call.1} parent=5 // pred_check_branch
        %123 = sbr.rel (%p120) target = $region12
      $region11: #{tpu_custom_call.1} parent=5 // pred_region
        %s124 = ssub.s32 %s16, 1
        // Predicated region
        $region13: #{tpu_custom_call.1} parent=11 // pred_check
          %p125 = pneg %p63
        $region14: #{tpu_custom_call.1} parent=11 // pred_check_branch
          %127 = sbr.rel (%p125) target = $region16
        $region15: #{tpu_custom_call.1} parent=11 // pred_region
          %s129 = ssub.s32 128, 128
          %130 = vsyncadd [#allocation6], %s129
          %s132 = sshll.u32 [#allocation5], 4
          %s133 = int_to_ptr.vmem [resolvable:$true] %s132
          %135 = dma.hbm_to_vmem [thread:$0]  %s1, 128, %s133, [#allocation6]
        $region16: #{tpu_custom_call.1} parent=11 // pred_fallthru
          _
        // Predicated region
        $region17: #{tpu_custom_call.1} parent=11 // pred_check
          %p136 = pneg %p84
        $region18: #{tpu_custom_call.1} parent=11 // pred_check_branch
          %138 = sbr.rel (%p136) target = $region20
        $region19: #{tpu_custom_call.1} parent=11 // pred_region
          _
        $region20: #{tpu_custom_call.1} parent=11 // pred_fallthru
          _
      $region12: #{tpu_custom_call.1} parent=5 // pred_fallthru
        _
      %p139 = scmp.lt.s32.totalorder %s16, 2
      // Predicated region
      $region21: #{tpu_custom_call.1} parent=5 // pred_check
        %p140 = pneg %p139
      $region22: #{tpu_custom_call.1} parent=5 // pred_check_branch
        %142 = sbr.rel (%p140) target = $region24
      $region23: #{tpu_custom_call.1} parent=5 // pred_region
        // Predicated region
        $region25: #{tpu_custom_call.1} parent=23 // pred_check
          %p143 = pneg %p36
        $region26: #{tpu_custom_call.1} parent=23 // pred_check_branch
          %145 = sbr.rel (%p143) target = $region28
        $region27: #{tpu_custom_call.1} parent=23 // pred_region
          %s146 = sand.u32 %s26, 1
          %s147 = scalar_lea.sflag [#allocation3], %s146
          %s148 = sand.u32 %s26, 1
          %s149 = smul.addr %s148, 4
          %s150 = scalar_lea.vmem [#allocation2], %s149
          %s152 = ssub.s32 64, 64
          %153 = vsyncadd %s147, %s152
          %s154 = smul.addr %s16, 64
          %s155 = scalar_lea.hbm %s0, %s154
          %s157 = sshll.u32 %s150, 4
          %s158 = int_to_ptr.vmem [resolvable:$true] %s157
          %160 = dma.hbm_to_vmem [thread:$0]  %s155, 64, %s158, %s147
        $region28: #{tpu_custom_call.1} parent=23 // pred_fallthru
          _
      $region24: #{tpu_custom_call.1} parent=5 // pred_fallthru
        _
      %p161 = scmp.le.s32.totalorder 1, %s16
      %p162 = scmp.lt.s32.totalorder %s16, 3
      %p163 = pnand %p161, %p162
      %p164 = pneg %p163
      // Predicated region
      $region29: #{tpu_custom_call.1} parent=5 // pred_check
        _
      $region30: #{tpu_custom_call.1} parent=5 // pred_check_branch
        %166 = sbr.rel (%p163) target = $region32
      $region31: #{tpu_custom_call.1} parent=5 // pred_region
        %s167 = ssub.s32 %s16, 1
        %s168 = sand.u32 %s29, 1
        %s169 = scalar_lea.sflag [#allocation3], %s168
        %s170 = sand.u32 %s29, 1
        %s171 = smul.addr %s170, 4
        %s172 = scalar_lea.vmem [#allocation2], %s171
        // Predicated region
        $region33: #{tpu_custom_call.1} parent=31 // pred_check
          %p173 = pneg %p42
        $region34: #{tpu_custom_call.1} parent=31 // pred_check_branch
          %175 = sbr.rel (%p173) target = $region36
        $region35: #{tpu_custom_call.1} parent=31 // pred_region
          %176 = dma.done %s169, 64
        $region36: #{tpu_custom_call.1} parent=31 // pred_fallthru
          _
        // Predicated region
        $region37: #{tpu_custom_call.1} parent=31 // pred_check
          %p177 = pneg %p63
        $region38: #{tpu_custom_call.1} parent=31 // pred_check_branch
          %179 = sbr.rel (%p177) target = $region40
        $region39: #{tpu_custom_call.1} parent=31 // pred_region
          %180 = dma.done [#allocation6], 128
        $region40: #{tpu_custom_call.1} parent=31 // pred_fallthru
          _
        %s181 = sand.u32 %s29, 1
        %s182 = scalar_lea.sflag [#allocation3], %s181
        %s183 = sand.u32 %s29, 1
        %s184 = smul.addr %s183, 4
        %s185 = scalar_lea.vmem [#allocation2], %s184
        %p186 = pneg %p42
        %p187 = pneg %p39
        %p188 = pneg %p63
        %p189 = pneg %p60
        %p190 = pneg %p84
        %p191 = pneg %p81
        %p192 = pneg %p110
        %p193 = pneg %p107
        %s194 = sand.u32 %s97, 1
        %s195 = scalar_lea.sflag [#allocation4], %s194
        %s196 = sand.u32 %s97, 1
        %s197 = smul.addr %s196, 8
        %s198 = scalar_lea.vmem [#allocation7], %s197
        %v200 = vld [vmem:[%s172] sm:$0xf]
        %v201 = vld [vmem:[#allocation5] sm:$0xff]
        %v202 = vld [vmem:[%s2] sm:$0x3]
        %v204 = vlaneseq
        %v205 = vshrl.u32 %v204, 7
        %v206 = vsub.s32 0, %v205
        %v207 = vrot.slane %v202, %v206
        %v208 = vlaneseq
        %v209 = vshrl.u32 %v208, 7
        %v210 = vsub.s32 1, %v209
        %v211 = vrot.slane %v202, %v210
        %v215 = vunpack.c.l.b16 %v201
        %v216 = vunpack.c.h.b16 %v201
        %v217 = vpack.c.b16 %v215, %v215
        %v218 = vpack.c.b16 %v216, %v216
        %vm219 = vcmask 64512
        %v221 = vsel %vm219, %v200, 0
        %vm223 = vcmask 1043456
        %v225 = vsel %vm223, %v217, 0
        %v228 = vsel %vm223, %v218, 0
        %230 = vmatprep.subr.bf16.mxu0 0
        %231 = vmatpush1.bf16.msra.mxu0 0
        %232 = vmatprep.subr.bf16.mxu0 0
        %233 = vmatpush1.bf16.msra.mxu0 0
        %234 = vmatprep.subr.bf16.mxu0 0
        %235 = vmatpush1.bf16.msra.mxu0 0
        %236 = vmatprep.subr.bf16.mxu0 0
        %237 = vmatpush1.bf16.msra.mxu0 0
        %238 = vmatprep.subr.bf16.mxu0 0
        %239 = vmatpush1.bf16.msra.mxu0 0
        %240 = vmatprep.subr.bf16.mxu0 0
        %241 = vmatpush1.bf16.msra.mxu0 0
        %242 = vmatprep.subr.bf16.mxu0 0
        %243 = vmatpush1.bf16.msra.mxu0 0
        %244 = vmatprep.subr.bf16.mxu0 %v228
        %245 = vmatpush1.bf16.msra.mxu0 %v225
        %246 = vmatprep.subr.bf16.mxu0 0
        %247 = vmatpush2.bf16.msra.mxu0 0
        %248 = vmatprep.subr.bf16.mxu0 0
        %249 = vmatpush2.bf16.msra.mxu0 0
        %250 = vmatprep.subr.bf16.mxu0 0
        %251 = vmatpush2.bf16.msra.mxu0 0
        %252 = vmatprep.subr.bf16.mxu0 0
        %253 = vmatpush2.bf16.msra.mxu0 0
        %254 = vmatprep.subr.bf16.mxu0 0
        %255 = vmatpush2.bf16.msra.mxu0 0
        %256 = vmatprep.subr.bf16.mxu0 0
        %257 = vmatpush2.bf16.msra.mxu0 0
        %258 = vmatprep.subr.bf16.mxu0 0
        %259 = vmatpush2.bf16.msra.mxu0 0
        %260 = vmatprep.subr.bf16.mxu0 0
        %261 = vmatpush2.bf16.msra.mxu0 0
        %262 = vmatprep.mubr.bf16.mxu0 0
        %263 = vmatmul.mubr.bf16.gmra.mxu0 %v221
        %v264 = vpop.f32.mrf.mxu0
        %v265 = vadd.f32 %v207, %v264
        %v266 = vpop.f32.mrf.mxu0
        %v267 = vadd.f32 %v211, %v266
        %v268 = vpop.f32.mrf.mxu0
        %v269 = vpop.f32.mrf.mxu0
        %270 = vdwg.mxu0
        %v271 = vpack.c.bf16 %v265, %v265
        %v272 = vpack.c.bf16 %v267, %v267
        %v275 = vunpack.c.l.b16 %v271
        %v276 = vunpack.c.l.b16 %v272
        %v277 = vpack.c.b16 %v276, %v275
        %279 = vst [vmem:[%s198] sm:$0xff] %v277
        %s280 = sand.u32 %s97, 1
        %s281 = scalar_lea.sflag [#allocation4], %s280
        %s282 = sand.u32 %s97, 1
        %s283 = smul.addr %s282, 8
        %s284 = scalar_lea.vmem [#allocation7], %s283
        // Predicated region
        $region41: #{tpu_custom_call.1} parent=31 // pred_check
          %p285 = pneg %p107
        $region42: #{tpu_custom_call.1} parent=31 // pred_check_branch
          %287 = sbr.rel (%p285) target = $region44
        $region43: #{tpu_custom_call.1} parent=31 // pred_region
          %s289 = ssub.s32 128, 128
          %290 = vsyncadd %s281, %s289
          %s291 = smul.addr %s21, 2
          %s292 = smul.addr %s291, 64
          %s293 = scalar_lea.hbm %s3, %s292
          %s295 = sshll.u32 %s284, 4
          %s296 = int_to_ptr.vmem [resolvable:$true] %s295
          %298 = dma.vmem_to_hbm [thread:$0]  %s296, 128, %s293, %s281
        $region44: #{tpu_custom_call.1} parent=31 // pred_fallthru
          _
      $region32: #{tpu_custom_call.1} parent=5 // pred_fallthru
        _
      %p299 = scmp.le.s32.totalorder 2, %s16
      // Predicated region
      $region45: #{tpu_custom_call.1} parent=5 // pred_check
        %p300 = pneg %p299
      $region46: #{tpu_custom_call.1} parent=5 // pred_check_branch
        %302 = sbr.rel (%p300) target = $region48
      $region47: #{tpu_custom_call.1} parent=5 // pred_region
        %s303 = ssub.s32 %s16, 2
        // Predicated region
        $region49: #{tpu_custom_call.1} parent=47 // pred_check
          %p304 = pneg %p113
        $region50: #{tpu_custom_call.1} parent=47 // pred_check_branch
          %306 = sbr.rel (%p304) target = $region52
        $region51: #{tpu_custom_call.1} parent=47 // pred_region
          %s307 = sand.u32 %s98, 1
          %s308 = scalar_lea.sflag [#allocation4], %s307
          %s309 = sand.u32 %s98, 1
          %s310 = smul.addr %s309, 8
          %s311 = scalar_lea.vmem [#allocation7], %s310
          %312 = dma.done %s308, 128
        $region52: #{tpu_custom_call.1} parent=47 // pred_fallthru
          _
      $region48: #{tpu_custom_call.1} parent=5 // pred_fallthru
        _
    $region6: #{tpu_custom_call.1} parent=1 // loop_footer
      %s20 = sadd.s32 1, %s16
    $region7: #{tpu_custom_call.1} parent=1 // loop_footer_branch
      %15 = sbr.rel target = $region3
    $region8: #{tpu_custom_call.1} parent=1 // loop_exit
      _
    %313 = vsyncpa [#allocation3], 1
    %s314 = scalar_lea.sflag [#allocation3], 1
    %315 = vsyncpa %s314, 1
    %316 = vsyncpa [#allocation6], 1
    %317 = vsyncpa [#allocation4], 1
    %s318 = scalar_lea.sflag [#allocation4], 1
    %319 = vsyncpa %s318, 1

</llo_original>
